<compile_context>
chip_gen: v7x
topology: tpu7x:2x2x1
jax: 0.10.0
libtpu: 0.0.40
codegen_flags: <defaults>
</compile_context>

<pallas_src>
import functools
import math

import jax
import jax.numpy as jnp
from jax import lax
from jax.experimental import pallas as pl
from jax.experimental.pallas import tpu as pltpu

PRIMITIVES = [
    'none', 'max_pool_3x3', 'avg_pool_3x3', 'skip_connect',
    'sep_conv_3x3', 'sep_conv_5x5', 'dil_conv_3x3', 'dil_conv_5x5',
]
RNN_PRIMITIVES = ['none', 'tanh', 'relu', 'sigmoid', 'identity']
BN_EPS = 1e-5

MM_TM = 512          # matmul row tile
DWPW_TM = 512        # fused depthwise+pointwise row tile
EW_TM = 512          # elementwise (weighted-sum) row tile
EW_LANE_TARGET = 512  # target lane width for lane-dense elementwise kernels
VMEM_LIMIT = 48 * 1024 * 1024   # explicit scoped-VMEM limit (<= 64 MiB on v7x)


# ----------------------------------------------------------------------------
# Tiling helpers
# ----------------------------------------------------------------------------

def _round_up(x, m):
    return ((x + m - 1) // m) * m


def _row_tiling(M, max_tm):
    """Pick (row tile, padded rows).

    Prefers exact divisors of M (no HBM pad copy) and >= 2 grid steps so both
    TensorCores get work on v7x; falls back to one full block, and only pads
    rows when M is large with no suitable divisor (rare here).
    """
    if M <= 16:
        return M, M
    hi = (min(max_tm, M // 2) // 8) * 8
    t = hi
    while t >= 8:
        if M % t == 0:
            return t, M
        t -= 8
    if M <= max_tm:
        return M, M
    return max_tm, _round_up(M, max_tm)


def _lane_pack(M, C, target=EW_LANE_TARGET):
    """Row-grouping factor r so elementwise kernels see (M//r, r*C) blocks with
    a lane-aligned (multiple of 128) minor dim -> unmasked vector stores."""
    base = 128 // math.gcd(C, 128)
    if base * C > 4 * target or M % base != 0:
        return 1
    r = base
    while r * 2 * C <= target and M % (r * 2) == 0:
        r *= 2
    return r


# ----------------------------------------------------------------------------
# Pallas kernels
# ----------------------------------------------------------------------------

def _mm_kernel(a_ref, w_ref, o_ref):
    o_ref[...] = jnp.dot(a_ref[...], w_ref[...],
                         preferred_element_type=jnp.float32).astype(o_ref.dtype)


def _mm_affine_relu_kernel(a_ref, s_ref, b_ref, w_ref, o_ref):
    # Fused prologue: deferred BatchNorm affine of the producer + this op's
    # ReLU, applied on the LHS before the MXU dot (VPU work hides under MXU).
    a = jnp.maximum(a_ref[...] * s_ref[...] + b_ref[...], 0.0)
    o_ref[...] = jnp.dot(a.astype(jnp.bfloat16), w_ref[...],
                         preferred_element_type=jnp.float32).astype(o_ref.dtype)


def pallas_matmul(a, w, *, scale=None, shift=None, out_dtype=jnp.bfloat16):
    """(M, K) @ (K, N); bf16 MXU operands, f32 accumulation.

    Optional fused LHS prologue max(a*scale + shift, 0) with per-channel (K,)
    scale/shift.  The contraction dim is a full-extent block (no HBM pad).
    """
    M, K = a.shape
    K2, N = w.shape
    assert K == K2
    a_b = a.astype(jnp.bfloat16)
    w_b = w.astype(jnp.bfloat16)
    tm, Mp = _row_tiling(M, MM_TM)
    if Mp != M:
        a_b = jnp.pad(a_b, ((0, Mp - M), (0, 0)))
    if scale is not None:
        s = scale.reshape(1, K).astype(jnp.float32)
        b = shift.reshape(1, K).astype(jnp.float32)
        kern = _mm_affine_relu_kernel
        in_specs = [pl.BlockSpec((tm, K), lambda i: (i, 0)),
                    pl.BlockSpec((1, K), lambda i: (0, 0)),
                    pl.BlockSpec((1, K), lambda i: (0, 0)),
                    pl.BlockSpec((K, N), lambda i: (0, 0))]
        args = (a_b, s, b, w_b)
    else:
        kern = _mm_kernel
        in_specs = [pl.BlockSpec((tm, K), lambda i: (i, 0)),
                    pl.BlockSpec((K, N), lambda i: (0, 0))]
        args = (a_b, w_b)
    out = pl.pallas_call(
        kern,
        out_shape=jax.ShapeDtypeStruct((Mp, N), out_dtype),
        grid_spec=pltpu.PrefetchScalarGridSpec(
            num_scalar_prefetch=0,
            grid=(Mp // tm,),
            in_specs=in_specs,
            out_specs=pl.BlockSpec((tm, N), lambda i: (i, 0))),
        compiler_params=pltpu.CompilerParams(
            dimension_semantics=("parallel",),
            vmem_limit_bytes=VMEM_LIMIT),
    )(*args)
    return out[:M] if Mp != M else out


@functools.lru_cache(maxsize=None)
def _make_dwpw_kernel(kk):
    def kernel(p_ref, dw_ref, pw_ref, o_ref):
        # depthwise tap-MAC (VPU, f32 acc) -> 1x1 pointwise matmul (MXU);
        # the depthwise result never touches HBM.  ReLU/affine of the input
        # was already applied in the wrapper (once, not per tap).
        acc = p_ref[0] * dw_ref[0]
        for t in range(1, kk):
            acc = acc + p_ref[t] * dw_ref[t]
        o_ref[...] = jnp.dot(acc.astype(jnp.bfloat16), pw_ref[...],
                             preferred_element_type=jnp.float32
                             ).astype(o_ref.dtype)
    return kernel


def pallas_dw_pw(patches, dw_taps, pw, out_dtype=jnp.bfloat16):
    """Fused depthwise (dilated) conv + 1x1 pointwise conv.

    patches: (KK, M, C) bf16 im2col taps (already ReLU'd / affined),
    dw_taps: (KK, C), pw: (C, Cout) -> (M, Cout) bf16.
    Channel dim is a full-extent block (no HBM pad), patches stay bf16.
    """
    KK, M, C = patches.shape
    Cout = pw.shape[-1]
    tm, Mp = _row_tiling(M, DWPW_TM)
    p = patches.astype(jnp.bfloat16)
    if Mp != M:
        p = jnp.pad(p, ((0, 0), (0, Mp - M), (0, 0)))
    dw = dw_taps.reshape(KK, 1, C).astype(jnp.float32)
    pw_b = pw.reshape(C, Cout).astype(jnp.bfloat16)
    out = pl.pallas_call(
        _make_dwpw_kernel(KK),
        out_shape=jax.ShapeDtypeStruct((Mp, Cout), out_dtype),
        grid_spec=pltpu.PrefetchScalarGridSpec(
            num_scalar_prefetch=0,
            grid=(Mp // tm,),
            in_specs=[pl.BlockSpec((KK, tm, C), lambda i: (0, i, 0)),
                      pl.BlockSpec((KK, 1, C), lambda i: (0, 0, 0)),
                      pl.BlockSpec((C, Cout), lambda i: (0, 0))],
            out_specs=pl.BlockSpec((tm, Cout), lambda i: (i, 0))),
        compiler_params=pltpu.CompilerParams(
            dimension_semantics=("parallel",),
            vmem_limit_bytes=VMEM_LIMIT),
    )(p, dw, pw_b)
    return out[:M] if Mp != M else out


@functools.lru_cache(maxsize=None)
def _make_wsum_kernel(n):
    def kernel(*refs):
        s_ref, b_ref = refs[0], refs[1]
        xs = refs[2:2 + n]
        o_ref = refs[2 + n]
        acc = xs[0][...] * s_ref[0] + b_ref[...]
        for k in range(1, n):
            acc = acc + xs[k][...] * s_ref[k]
        o_ref[...] = acc.astype(o_ref.dtype)
    return kernel


def pallas_weighted_affine_sum(items, out_dtype=jnp.bfloat16):
    """One node's DARTS mixture: sum_k (x_k * scale_k + shift_k).

    items: list of (raw 4-D bf16 tensor, per-channel scale (C,), shift (C,));
    the alpha weight and any deferred BatchNorm affine are pre-folded into
    scale/shift.  Inputs are viewed lane-densely as (M/r, r*C) with r*C a
    multiple of 128; scales are tiled to match.
    """
    n = len(items)
    shape = items[0][0].shape
    C = shape[-1]
    M = 1
    for d in shape[:-1]:
        M *= d
    r = _lane_pack(M, C)
    L = r * C
    Mr = M // r
    xs = [x.reshape(Mr, L).astype(jnp.bfloat16) for x, _, _ in items]
    scales = jnp.stack(
        [jnp.tile(s.astype(jnp.float32), r) for _, s, _ in items]
    ).reshape(n, 1, L)
    bias = jnp.tile(
        sum(b.astype(jnp.float32) for _, _, b in items), r).reshape(1, L)
    # VMEM-budgeted row tile (n inputs are double-buffered).
    per_row = (n + 1) * L * 2 * 2
    cap = max(8, ((16 * 1024 * 1024) // per_row) // 8 * 8)
    tm, Mp = _row_tiling(Mr, min(EW_TM, cap))
    if Mp != Mr:
        xs = [jnp.pad(x, ((0, Mp - Mr), (0, 0))) for x in xs]
    out = pl.pallas_call(
        _make_wsum_kernel(n),
        out_shape=jax.ShapeDtypeStruct((Mp, L), out_dtype),
        grid_spec=pltpu.PrefetchScalarGridSpec(
            num_scalar_prefetch=0,
            grid=(Mp // tm,),
            in_specs=[pl.BlockSpec((n, 1, L), lambda i: (0, 0, 0)),
                      pl.BlockSpec((1, L), lambda i: (0, 0))]
                     + [pl.BlockSpec((tm, L), lambda i: (i, 0))
                        for _ in range(n)],
            out_specs=pl.BlockSpec((tm, L), lambda i: (i, 0))),
        compiler_params=pltpu.CompilerParams(
            dimension_semantics=("parallel",),
            vmem_limit_bytes=VMEM_LIMIT),
    )(scales, bias, *xs)
    out = out[:Mr] if Mp != Mr else out
    return out.reshape(shape)


# ----------------------------------------------------------------------------
# BatchNorm bookkeeping (training-mode batch statistics, affine deferred)
# ----------------------------------------------------------------------------
# Every activation is carried as an "ADT": (raw bf16 tensor, scale, shift)
# with the pending per-channel affine y = raw * scale + shift never
# materialized in HBM; consumers fuse it.

def _channel_mean_var(x):
    C = x.shape[-1]
    xf = x.reshape(-1, C).astype(jnp.float32)
    mean = jnp.mean(xf, axis=0)
    var = jnp.maximum(jnp.mean(xf * xf, axis=0) - mean * mean, 0.0)
    return mean, var


def bn_scale_shift(x, gamma=None, beta=None, eps=BN_EPS):
    mean, var = _channel_mean_var(x)
    C = x.shape[-1]
    g = jnp.ones((C,), jnp.float32) if gamma is None else gamma
    scale = g * lax.rsqrt(var + eps)
    shift = -mean * scale
    if beta is not None:
        shift = shift + beta
    return scale, shift


def _identity_affine(C):
    return jnp.ones((C,), jnp.float32), jnp.zeros((C,), jnp.float32)


def _relu_affine(adt):
    raw, s, b = adt
    return jnp.maximum(raw.astype(jnp.float32) * s + b, 0.0).astype(jnp.bfloat16)


# ----------------------------------------------------------------------------
# Conv / pooling building blocks
# ----------------------------------------------------------------------------

def _conv_out_size(H, k, stride, padding, dilation):
    return (H + 2 * padding - dilation * (k - 1) - 1) // stride + 1


def _extract_taps(x, kh, kw, stride, padding, dilation):
    B, H, W, C = x.shape
    oH = _conv_out_size(H, kh, stride, padding, dilation)
    oW = _conv_out_size(W, kw, stride, padding, dilation)
    xp = jnp.pad(x, ((0, 0), (padding, padding), (padding, padding), (0, 0)))
    taps = []
    for i in range(kh):
        for j in range(kw):
            sl = xp[:,
                    i * dilation: i * dilation + (oH - 1) * stride + 1: stride,
                    j * dilation: j * dilation + (oW - 1) * stride + 1: stride,
                    :]
            taps.append(sl)
    return taps, oH, oW


def stem_forward(p, x):
    """Conv 3x3 (pad 1) + BN (affine deferred into consumers)."""
    w = p['w']
    kh, kw, Cin, Cc = w.shape
    B = x.shape[0]
    taps, oH, oW = _extract_taps(x.astype(jnp.bfloat16), kh, kw, 1, 1, 1)
    patches = jnp.stack(taps, axis=3).reshape(B * oH * oW, kh * kw * Cin)
    raw = pallas_matmul(patches, w.reshape(kh * kw * Cin, Cc))
    raw = raw.reshape(B, oH, oW, Cc)
    sc, sh = bn_scale_shift(raw, p['gamma'], p['beta'])
    return raw, sc, sh


def std_conv_adt(adt, w):
    """ReLU - 1x1 conv - BN(affine=False); input affine + ReLU fused into the
    matmul prologue, output BN affine deferred."""
    raw, s, b = adt
    B, H, W_, C = raw.shape
    out = pallas_matmul(raw.reshape(-1, C), w.reshape(C, -1),
                        scale=s, shift=b)
    out = out.reshape(B, H, W_, -1)
    sc, sh = bn_scale_shift(out)
    return out, sc, sh


def factorized_reduce_adt(adt, p):
    """ReLU - 2x(1x1 stride-2 conv) - concat - BN.  The two convs are batched
    into one block-diagonal matmul (shared LHS read, one launch)."""
    raw, s, b = adt
    B, H, W_, C = raw.shape
    x1 = raw[:, ::2, ::2, :]
    x2 = raw[:, 1::2, 1::2, :]
    lhs = jnp.concatenate([x1, x2], axis=-1).reshape(-1, 2 * C)
    w1 = p['w1'].reshape(C, -1)
    w2 = p['w2'].reshape(C, -1)
    o1, o2 = w1.shape[-1], w2.shape[-1]
    wbd = jnp.zeros((2 * C, o1 + o2), jnp.float32)
    wbd = wbd.at[:C, :o1].set(w1).at[C:, o1:].set(w2)
    out = pallas_matmul(lhs, wbd,
                        scale=jnp.concatenate([s, s]),
                        shift=jnp.concatenate([b, b]))
    out = out.reshape(B, H // 2, W_ // 2, o1 + o2)
    sc, sh = bn_scale_shift(out)
    return out, sc, sh


def dw_pw_block(adt, dw, pw, stride, padding, dilation):
    """ReLU - depthwise (dilated) conv - pointwise 1x1 - BN(affine=False).
    The pending input affine + ReLU is applied once in XLA (fused with the
    pad), the dw+pw run in one Pallas kernel, the output BN affine is deferred.
    """
    # TODO(synk): an in-kernel halo/row-block tap scheme would avoid the
    # (k*k, M, C) im2col materialization in HBM; im2col (bf16) is kept here.
    z = _relu_affine(adt)
    kh, kw, C = dw.shape
    B = z.shape[0]
    taps, oH, oW = _extract_taps(z, kh, kw, stride, padding, dilation)
    patches = jnp.stack([t.reshape(-1, C) for t in taps], axis=0)
    raw = pallas_dw_pw(patches, dw.reshape(kh * kw, C),
                       pw.reshape(C, pw.shape[-1]))
    raw = raw.reshape(B, oH, oW, -1)
    sc, sh = bn_scale_shift(raw)
    return raw, sc, sh


def sep_conv(adt, p, stride, padding):
    adt = dw_pw_block(adt, p['dw1'], p['pw1'], stride, padding, 1)
    return dw_pw_block(adt, p['dw2'], p['pw2'], 1, padding, 1)


def dil_conv_op(adt, p, stride, padding, dilation):
    return dw_pw_block(adt, p['dw'], p['pw'], stride, padding, dilation)


_POOL_WIN = (1, 3, 3, 1)
_POOL_PAD = [(0, 0), (1, 1), (1, 1), (0, 0)]


def max_pool_3x3(x, stride):
    y = lax.reduce_window(x.astype(jnp.float32), -jnp.inf, lax.max, _POOL_WIN,
                          (1, stride, stride, 1), _POOL_PAD)
    return y.astype(jnp.bfloat16)


def avg_pool_3x3(x, stride):              # count_include_pad=False
    xf = x.astype(jnp.float32)
    s = lax.reduce_window(xf, 0.0, lax.add, _POOL_WIN,
                          (1, stride, stride, 1), _POOL_PAD)
    ones = jnp.ones(x.shape[:3] + (1,), jnp.float32)
    cnt = lax.reduce_window(ones, 0.0, lax.add, _POOL_WIN,
                            (1, stride, stride, 1), _POOL_PAD)
    return (s / cnt).astype(jnp.bfloat16)


def pool_bn(kind, adt, stride):
    """Pool + BN(affine=False).  The pending input affine (scale > 0) commutes
    with both pools, so stats are composed analytically and the whole affine
    chain stays deferred (folded into the weighted-sum kernel)."""
    raw, s, b = adt
    pooled = max_pool_3x3(raw, stride) if kind == 'max' else avg_pool_3x3(raw, stride)
    m_r, v_r = _channel_mean_var(pooled)
    m_a = s * m_r + b
    v_a = s * s * v_r
    inv = lax.rsqrt(v_a + BN_EPS)
    return pooled, s * inv, (b - m_a) * inv


def apply_primitive(name, adt, stride, p):
    if name == 'max_pool_3x3':
        return pool_bn('max', adt, stride)
    if name == 'avg_pool_3x3':
        return pool_bn('avg', adt, stride)
    if name == 'skip_connect':
        return adt if stride == 1 else factorized_reduce_adt(adt, p)
    if name == 'sep_conv_3x3':
        return sep_conv(adt, p, stride, 1)
    if name == 'sep_conv_5x5':
        return sep_conv(adt, p, stride, 2)
    if name == 'dil_conv_3x3':
        return dil_conv_op(adt, p, stride, 2, 2)
    if name == 'dil_conv_5x5':
        return dil_conv_op(adt, p, stride, 4, 2)
    raise ValueError(name)


# ----------------------------------------------------------------------------
# Cells
# ----------------------------------------------------------------------------

def cell_forward(cell_p, s0, s1, w_dag):
    if cell_p['pre0']['type'] == 'fr':
        s0 = factorized_reduce_adt(s0, cell_p['pre0'])
    else:
        s0 = std_conv_adt(s0, cell_p['pre0']['w'])
    s1 = std_conv_adt(s1, cell_p['pre1']['w'])
    states = [s0, s1]
    for edges, w_node in zip(cell_p['dag'], w_dag):
        items = []
        for j, edge_p in enumerate(edges):
            adt = states[j]
            stride = edge_p['stride']
            # 'none' (index 0) contributes exactly zero -> skipped entirely.
            for idx, name in enumerate(PRIMITIVES):
                if name == 'none':
                    continue
                raw, sc, sh = apply_primitive(name, adt, stride,
                                              edge_p['ops'][name])
                w = w_node[j, idx]
                items.append((raw, w * sc, w * sh))
        node = pallas_weighted_affine_sum(items)
        states.append((node,) + _identity_affine(node.shape[-1]))
    out = jnp.concatenate([st[0] for st in states[2:]], axis=-1)
    return (out,) + _identity_affine(out.shape[-1])


# TODO(synk): RNNSearchCell source is not provided in the reference; this keeps
# the DARTS-style DAG from the previous version (per-edge learned (C_p, C_p)
# projection + alpha-weighted mixture of RNN_PRIMITIVES activations, node-mean
# output), but batches all edge projections sharing a source state into one
# Pallas matmul along the output (N) axis.
def rnn_cell_forward(cell_p, s0, s1, w_dag):
    n = len(w_dag)
    Cp = s0.shape[-1]
    states = [s0, s1]
    proj = {}

    def project(j):
        consumers = [i for i in range(n) if i + 1 >= j]
        if not consumers:
            return
        wcat = jnp.concatenate([cell_p[i][j] for i in consumers], axis=1)
        h_all = pallas_matmul(states[j], wcat, out_dtype=jnp.float32)
        for idx, i in enumerate(consumers):
            proj[(i, j)] = h_all[:, idx * Cp:(idx + 1) * Cp]

    project(0)
    project(1)
    for i, w_node in enumerate(w_dag):
        s_cur = None
        for j in range(i + 2):
            h = proj[(i, j)]
            w = w_node[j]
            mix = (w[1] * jnp.tanh(h) + w[2] * jnp.maximum(h, 0.0)
                   + w[3] * jax.nn.sigmoid(h) + w[4] * h)  # w[0] -> 'none'
            s_cur = mix if s_cur is None else s_cur + mix
        states.append(s_cur)
        project(i + 2)
    return jnp.mean(jnp.stack(states[2:], axis=0), axis=0)


def _gap(adt):
    raw, s, b = adt
    return jnp.mean(raw.astype(jnp.float32), axis=(1, 2)) * s + b


def search_cnn_forward(net_p, x, w_normal, w_reduce, w_rnn):
    s = stem_forward(net_p['stem'], x)
    s0 = s1 = s
    for cell_p in net_p['cells']:
        w = w_reduce if cell_p['reduction'] else w_normal
        s0, s1 = s1, cell_forward(cell_p, s0, s1, w)
    rnn_s1 = _gap(s1)     # AdaptiveAvgPool2d(1) + flatten
    rnn_s0 = _gap(s0)
    for cell_p in net_p['rnn_cells']:
        rnn_s0, rnn_s1 = rnn_s1, rnn_cell_forward(cell_p, rnn_s0, rnn_s1, w_rnn)
    logits = pallas_matmul(rnn_s1, net_p['linear']['w'],
                           out_dtype=jnp.float32) + net_p['linear']['b']
    return logits


def controller_forward(params, x_nchw):
    """SearchCNNController.forward (single-device path)."""
    w_normal = [jax.nn.softmax(a, axis=-1) for a in params['alpha_normal']]
    w_reduce = [jax.nn.softmax(a, axis=-1) for a in params['alpha_reduce']]
    w_rnn = [jax.nn.softmax(a, axis=-1) for a in params['alpha_rnn']]
    x = jnp.transpose(x_nchw, (0, 2, 3, 1)).astype(jnp.float32)  # NCHW -> NHWC
    return search_cnn_forward(params['net'], x, w_normal, w_reduce, w_rnn)


# ----------------------------------------------------------------------------
# Deterministic parameter initialization (shapes follow the PyTorch __init__)
# ----------------------------------------------------------------------------

class KeyGen:
    def __init__(self, seed=0):
        self._base = jax.random.PRNGKey(seed)
        self._n = 0

    def __call__(self):
        self._n += 1
        return jax.random.fold_in(self._base, self._n)


def _normal(kg, shape, scale=0.1):
    return scale * jax.random.normal(kg(), shape, dtype=jnp.float32)


def init_mixed_op(kg, C, stride):
    ops = {}
    for name in PRIMITIVES:
        if name in ('none', 'max_pool_3x3', 'avg_pool_3x3'):
            ops[name] = None
        elif name == 'skip_connect':
            ops[name] = None if stride == 1 else {
                'w1': _normal(kg, (1, 1, C, C // 2)),
                'w2': _normal(kg, (1, 1, C, C // 2))}
        elif name in ('sep_conv_3x3', 'sep_conv_5x5'):
            k = 3 if name == 'sep_conv_3x3' else 5
            ops[name] = {'dw1': _normal(kg, (k, k, C)),
                         'pw1': _normal(kg, (1, 1, C, C)),
                         'dw2': _normal(kg, (k, k, C)),
                         'pw2': _normal(kg, (1, 1, C, C))}
        else:  # dil convs
            k = 3 if name == 'dil_conv_3x3' else 5
            ops[name] = {'dw': _normal(kg, (k, k, C)),
                         'pw': _normal(kg, (1, 1, C, C))}
    return ops


def init_cell(kg, n_nodes, C_pp, C_p, C, reduction_p, reduction):
    cell = {'reduction': reduction}
    if reduction_p:
        cell['pre0'] = {'type': 'fr',
                        'w1': _normal(kg, (1, 1, C_pp, C // 2)),
                        'w2': _normal(kg, (1, 1, C_pp, C // 2))}
    else:
        cell['pre0'] = {'type': 'std', 'w': _normal(kg, (1, 1, C_pp, C))}
    cell['pre1'] = {'type': 'std', 'w': _normal(kg, (1, 1, C_p, C))}
    dag = []
    for i in range(n_nodes):
        edges = []
        for j in range(2 + i):
            stride = 2 if reduction and j < 2 else 1
            edges.append({'stride': stride, 'ops': init_mixed_op(kg, C, stride)})
        dag.append(edges)
    cell['dag'] = dag
    return cell


def init_controller(kg, C_in, C, n_classes, n_layers, n_nodes=4,
                    stem_multiplier=3, n_layers_rnn=4, n_nodes_rnn=4):
    n_ops, n_ops_rnn = len(PRIMITIVES), len(RNN_PRIMITIVES)
    params = {
        'alpha_normal': [_normal(kg, (i + 2, n_ops), scale=1e-3)
                         for i in range(n_nodes)],
        'alpha_reduce': [_normal(kg, (i + 2, n_ops), scale=1e-3)
                         for i in range(n_nodes)],
        'alpha_rnn': [_normal(kg, (i + 2, n_ops_rnn), scale=1e-3)
                      for i in range(n_nodes_rnn)],
    }

    C_cur = stem_multiplier * C
    net = {'stem': {'w': _normal(kg, (3, 3, C_in, C_cur)),
                    'gamma': jnp.ones((C_cur,), jnp.float32),
                    'beta': jnp.zeros((C_cur,), jnp.float32)}}
    C_pp, C_p, C_cur = C_cur, C_cur, C
    cells = []
    reduction_p = False
    for i in range(n_layers):
        if i in (n_layers // 3, 2 * n_layers // 3):
            C_cur *= 2
            reduction = True
        else:
            reduction = False
        cells.append(init_cell(kg, n_nodes, C_pp, C_p, C_cur,
                               reduction_p, reduction))
        reduction_p = reduction
        C_cur_out = C_cur * n_nodes
        C_pp, C_p = C_p, C_cur_out
    net['cells'] = cells
    net['linear'] = {'w': _normal(kg, (C_p, n_classes)),
                     'b': jnp.zeros((n_classes,), jnp.float32)}
    rnn_cells = []
    for _ in range(n_layers_rnn):
        cell = []
        for i in range(n_nodes_rnn):
            cell.append([_normal(kg, (C_p, C_p), scale=1.0 / (C_p ** 0.5))
                         for _ in range(i + 2)])
        rnn_cells.append(cell)
    net['rnn_cells'] = rnn_cells
    params['net'] = net
    return params


# ----------------------------------------------------------------------------

if __name__ == "__main__":
    # Small but structurally faithful configuration.
    C_in, C, n_classes = 4, 8, 7
    n_layers, n_nodes = 4, 2          # reductions at layers 1 and 2
    n_layers_rnn, n_nodes_rnn = 2, 2
    B, H, W = 2, 16, 16

    kg = KeyGen(0)
    params = init_controller(kg, C_in, C, n_classes, n_layers, n_nodes,
                             stem_multiplier=3,
                             n_layers_rnn=n_layers_rnn,
                             n_nodes_rnn=n_nodes_rnn)

    x = jax.random.normal(jax.random.PRNGKey(0), (B, C_in, H, W),
                          dtype=jnp.float32)   # NCHW, like the PyTorch module

    logits = controller_forward(params, x)
    logits = jax.block_until_ready(logits)
    assert logits.shape == (B, n_classes), logits.shape
    assert bool(jnp.all(jnp.isfinite(logits)))
    print("KERNEL_OK")
</pallas_src>

<mosaic_0001>
module attributes {stable_mosaic.version = 11 : i64} {
  func.func @_mm_kernel(%arg0: i32, %arg1: memref<256x36xbf16, #tpu.memory_space<vmem>>, %arg2: memref<36x24xbf16, #tpu.memory_space<vmem>>, %arg3: memref<256x24xbf16, #tpu.memory_space<vmem>>) attributes {dimension_semantics = [#tpu.dimension_semantics<parallel>], iteration_bounds = array<i64: 2>, scalar_prefetch = 0 : i64, scratch_operands = 0 : i64, tpu.core_type = #tpu.core_type<tc>, window_params = [{transform_indices = @transform_0, window_bounds = array<i64: 256, 36>}, {pipeline_mode = #tpu.pipeline_mode<synchronous>, transform_indices = @transform_1, window_bounds = array<i64: 36, 24>}, {transform_indices = @transform_2, window_bounds = array<i64: 256, 24>}]} {
    %c0 = arith.constant 0 : index
    %c0_0 = arith.constant 0 : index
    %0 = vector.load %arg1[%c0, %c0_0] : memref<256x36xbf16, #tpu.memory_space<vmem>>, vector<256x36xbf16>
    %c0_1 = arith.constant 0 : index
    %c0_2 = arith.constant 0 : index
    %1 = vector.load %arg2[%c0_1, %c0_2] : memref<36x24xbf16, #tpu.memory_space<vmem>>, vector<36x24xbf16>
    %cst = arith.constant dense<0.000000e+00> : vector<256x24xf32>
    %2 = tpu.matmul %0, %1, %cst {dimension_numbers = #tpu.dot_dimension_numbers<[1], [0], [0], [1], [0, 0, 1, 1], [], []>} : vector<256x36xbf16>, vector<36x24xbf16>, vector<256x24xf32> -> vector<256x24xf32>
    %3 = arith.truncf %2 : vector<256x24xf32> to vector<256x24xbf16>
    %c0_3 = arith.constant 0 : index
    %c0_4 = arith.constant 0 : index
    %4 = vector.load %arg3[%c0_3, %c0_4] : memref<256x24xbf16, #tpu.memory_space<vmem>>, vector<256x24xbf16>
    tpu.vector_store %arg3[%c0_3, %c0_4], %3 {strides = array<i32>} : memref<256x24xbf16, #tpu.memory_space<vmem>>, vector<256x24xbf16>,
    return
  }
  func.func @transform_0(%arg0: i32) -> (i32, i32) {
    %c0_i32 = arith.constant 0 : i32
    %c0_i32_0 = arith.constant 0 : i32
    return %arg0, %c0_i32 : i32, i32
  }
  func.func @transform_1(%arg0: i32) -> (i32, i32) {
    %c0_i32 = arith.constant 0 : i32
    %c0_i32_0 = arith.constant 0 : i32
    %c0_i32_1 = arith.constant 0 : i32
    return %c0_i32, %c0_i32_0 : i32, i32
  }
  func.func @transform_2(%arg0: i32) -> (i32, i32) {
    %c0_i32 = arith.constant 0 : i32
    %c0_i32_0 = arith.constant 0 : i32
    return %arg0, %c0_i32 : i32, i32
  }
}

</mosaic_0001>

<llo_original>
// kernel: tpu_custom_call.1
$region0: #{tpu_custom_call.1}
  #allocation0 [shape = 'u32[]', space=smem, size = 0x4, offset = 0x4, fixed_abs, tag = 'smem constant byte address 0x4 - core index']
  #allocation1 [shape = 'u32[144,128]{1,0:T(1,128)}', space=vmem, size = 0x12000, scoped, tag = 'internal scratch']
  %s0 = inlined_call_operand.vmem [shape: bf16[512,36], index: 0, kind: input, shape index: {}]
  %s1 = inlined_call_operand.vmem [shape: bf16[36,24], index: 1, kind: input, shape index: {}]
  %s2 = inlined_call_operand.vmem [shape: bf16[512,24], index: 2, kind: output, shape index: {}]
  %s3 = sld [smem:[#allocation0]]
  $region41: #{tpu_custom_call.1} parent=0
    _
  %s5 = ssub.s32 1, %s3
  %s6 = scalar_select 0, %s5, %s3
  loop: start=0, step=1, limit=4
  $region2: #{tpu_custom_call.1} parent=0 // loop_pre_header
    _
  $region3: #{tpu_custom_call.1} parent=0 // loop_header
    %s8 = sphi 0, %s12
    %p9 = scmp.ge.s32.totalorder %s8, 4
    %s18 = sphi 0, %s20
    %s21 = sphi 0, %s18
    %s22 = sphi 0, %s21
    %s38 = sphi 0, %s22
    %s42 = sphi 0, %s42
    %s44 = sphi 0, %s42
    %s45 = sphi 0, %s44
    %s59 = sphi 0, %s45
    %s65 = sphi 0, %s67
    %s68 = sphi 0, %s65
    %s69 = sphi 0, %s68
    %s85 = sphi 0, %s69
  $region4: #{tpu_custom_call.1} parent=0 // loop_header_branch
    %11 = sbr.rel (%p9) target = $region8
  $region5: #{tpu_custom_call.1} parent=0 // loop_body
    %s13 = ssub.s32 %s8, 1
    %s14 = ssub.s32 %s8, 2
    %s15 = sadd.s32 %s8, 1
    %s16 = ssub.s32 %s8, %s15
    %p17 = scmp.eq.s32.totalorder %s16, 0
    %s19 = sadd.s32 %s18, 1
    %s20 = scalar_select %p17, %s18, %s19
    %p23 = pneg %p17
    %p24 = scmp.eq.s32.totalorder %s8, 1
    %p25 = por %p23, %p24
    %p26 = scmp.ne.s32.totalorder %s18, %s21
    %p27 = scmp.eq.s32.totalorder %s8, 0
    %p28 = por %p26, %p27
    %p29 = scmp.ne.s32.totalorder %s18, %s21
    %p30 = scmp.eq.s32.totalorder %s13, 1
    %p31 = por %p29, %p30
    %p32 = scmp.ne.s32.totalorder %s21, %s22
    %p33 = scmp.eq.s32.totalorder %s13, 0
    %p34 = por %p32, %p33
    %p35 = scmp.ne.s32.totalorder %s21, %s22
    %p36 = scmp.eq.s32.totalorder %s14, 1
    %p37 = por %p35, %p36
    %p39 = scmp.ne.s32.totalorder %s22, %s38
    %p40 = scmp.eq.s32.totalorder %s14, 0
    %p41 = por %p39, %p40
    %s43 = sadd.s32 %s42, 1
    %p46 = scmp.eq.s32.totalorder %s8, 1
    %p47 = scmp.ne.s32.totalorder %s42, %s44
    %p48 = scmp.eq.s32.totalorder %s8, 0
    %p49 = por %p47, %p48
    %p50 = scmp.ne.s32.totalorder %s42, %s44
    %p51 = scmp.eq.s32.totalorder %s13, 1
    %p52 = por %p50, %p51
    %p53 = scmp.ne.s32.totalorder %s44, %s45
    %p54 = scmp.eq.s32.totalorder %s13, 0
    %p55 = por %p53, %p54
    %p56 = scmp.ne.s32.totalorder %s44, %s45
    %p57 = scmp.eq.s32.totalorder %s14, 1
    %p58 = por %p56, %p57
    %p60 = scmp.ne.s32.totalorder %s45, %s59
    %p61 = scmp.eq.s32.totalorder %s14, 0
    %p62 = por %p60, %p61
    %s63 = ssub.s32 %s8, %s15
    %p64 = scmp.eq.s32.totalorder %s63, 0
    %s66 = sadd.s32 %s65, 1
    %s67 = scalar_select %p64, %s65, %s66
    %p70 = pneg %p64
    %p71 = scmp.eq.s32.totalorder %s8, 1
    %p72 = por %p70, %p71
    %p73 = scmp.ne.s32.totalorder %s65, %s68
    %p74 = scmp.eq.s32.totalorder %s8, 0
    %p75 = por %p73, %p74
    %p76 = scmp.ne.s32.totalorder %s65, %s68
    %p77 = scmp.eq.s32.totalorder %s13, 1
    %p78 = por %p76, %p77
    %p79 = scmp.ne.s32.totalorder %s68, %s69
    %p80 = scmp.eq.s32.totalorder %s13, 0
    %p81 = por %p79, %p80
    %p82 = scmp.ne.s32.totalorder %s68, %s69
    %p83 = scmp.eq.s32.totalorder %s14, 1
    %p84 = por %p82, %p83
    %p86 = scmp.ne.s32.totalorder %s69, %s85
    %p87 = scmp.eq.s32.totalorder %s14, 0
    %p88 = por %p86, %p87
    %p89 = scmp.le.s32.totalorder 1, %s8
    %p90 = scmp.lt.s32.totalorder %s8, 3
    %p91 = pnand %p89, %p90
    %p92 = pneg %p91
    // Predicated region
    $region9: #{tpu_custom_call.1} parent=5 // pred_check
      _
    $region10: #{tpu_custom_call.1} parent=5 // pred_check_branch
      %94 = sbr.rel (%p91) target = $region12
    $region11: #{tpu_custom_call.1} parent=5 // pred_region
      %s95 = ssub.s32 %s8, 1
      // Predicated region
      $region13: #{tpu_custom_call.1} parent=11 // pred_check
        %p96 = pneg %p55
      $region14: #{tpu_custom_call.1} parent=11 // pred_check_branch
        %98 = sbr.rel (%p96) target = $region16
      $region15: #{tpu_custom_call.1} parent=11 // pred_region
        _
      $region16: #{tpu_custom_call.1} parent=11 // pred_fallthru
        _
    $region12: #{tpu_custom_call.1} parent=5 // pred_fallthru
      _
    %p99 = scmp.lt.s32.totalorder %s8, 2
    // Predicated region
    $region17: #{tpu_custom_call.1} parent=5 // pred_check
      %p100 = pneg %p99
    $region18: #{tpu_custom_call.1} parent=5 // pred_check_branch
      %102 = sbr.rel (%p100) target = $region20
    $region19: #{tpu_custom_call.1} parent=5 // pred_region
      // Predicated region
      $region21: #{tpu_custom_call.1} parent=19 // pred_check
        %p103 = pneg %p28
      $region22: #{tpu_custom_call.1} parent=19 // pred_check_branch
        %105 = sbr.rel (%p103) target = $region24
      $region23: #{tpu_custom_call.1} parent=19 // pred_region
        %s106 = smul.u32 32, %s8
        %p107 = scmp.lt.s32.totalorder %s106, 63
        %s108 = scalar_select %p107, %s106, 63
        %s109 = smul.addr %s108, 4
        %s110 = scalar_lea.vmem %s0, %s109
        %s111 = smul.u32 32, %s8
      $region24: #{tpu_custom_call.1} parent=19 // pred_fallthru
        _
    $region20: #{tpu_custom_call.1} parent=5 // pred_fallthru
      _
    %p112 = scmp.le.s32.totalorder 1, %s8
    %p113 = scmp.lt.s32.totalorder %s8, 3
    %p114 = pnand %p112, %p113
    %p115 = pneg %p114
    // Predicated region
    $region25: #{tpu_custom_call.1} parent=5 // pred_check
      _
    $region26: #{tpu_custom_call.1} parent=5 // pred_check_branch
      %117 = sbr.rel (%p114) target = $region28
    $region27: #{tpu_custom_call.1} parent=5 // pred_region
      %s118 = ssub.s32 %s8, 1
      %s119 = smul.u32 32, %s13
      %p120 = scmp.lt.s32.totalorder %s119, 63
      %s121 = scalar_select %p120, %s119, 63
      %s122 = smul.addr %s121, 4
      %s123 = scalar_lea.vmem %s0, %s122
      %p124 = pneg %p34
      %p125 = pneg %p31
      %p126 = pneg %p55
      %p127 = pneg %p52
      %p128 = pneg %p81
      %p129 = pneg %p78
      %s130 = smul.u32 32, %s13
      %p131 = scmp.lt.s32.totalorder %s130, 63
      %s132 = scalar_select %p131, %s130, 63
      %s133 = smul.addr %s132, 4
      %s134 = scalar_lea.vmem %s2, %s133
      %s135 = smul.u32 32, %s13
      %p136 = scmp.lt.s32.totalorder %s135, 63
      %s137 = scalar_select %p136, %s135, 63
      %s138 = smul.addr %s137, 4
      %s139 = scalar_lea.vmem %s0, %s138
      %s140 = smul.u32 32, %s13
      %s141 = smul.u32 32, %s13
      %p142 = scmp.lt.s32.totalorder %s141, 63
      %s143 = scalar_select %p142, %s141, 63
      %s144 = smul.addr %s143, 4
      %s145 = scalar_lea.vmem %s2, %s144
      %s146 = smul.u32 32, %s13
      %v148 = vld [vmem:[%s139] sm:$0xf]
      %v149 = vld [vmem:[%s139 + $0x4] sm:$0xf]
      %v150 = vld [vmem:[%s139 + $0x8] sm:$0xf]
      %v151 = vld [vmem:[%s139 + $0xc] sm:$0xf]
      %v152 = vld [vmem:[%s139 + $0x10] sm:$0xf]
      %v153 = vld [vmem:[%s139 + $0x14] sm:$0xf]
      %v154 = vld [vmem:[%s139 + $0x18] sm:$0xf]
      %v155 = vld [vmem:[%s139 + $0x1c] sm:$0xf]
      %v156 = vld [vmem:[%s139 + $0x20] sm:$0xf]
      %v157 = vld [vmem:[%s139 + $0x24] sm:$0xf]
      %v158 = vld [vmem:[%s139 + $0x28] sm:$0xf]
      %v159 = vld [vmem:[%s139 + $0x2c] sm:$0xf]
      %v160 = vld [vmem:[%s139 + $0x30] sm:$0xf]
      %v161 = vld [vmem:[%s139 + $0x34] sm:$0xf]
      %v162 = vld [vmem:[%s139 + $0x38] sm:$0xf]
      %v163 = vld [vmem:[%s139 + $0x3c] sm:$0xf]
      %v164 = vld [vmem:[%s139 + $0x40] sm:$0xf]
      %v165 = vld [vmem:[%s139 + $0x44] sm:$0xf]
      %v166 = vld [vmem:[%s139 + $0x48] sm:$0xf]
      %v167 = vld [vmem:[%s139 + $0x4c] sm:$0xf]
      %v168 = vld [vmem:[%s139 + $0x50] sm:$0xf]
      %v169 = vld [vmem:[%s139 + $0x54] sm:$0xf]
      %v170 = vld [vmem:[%s139 + $0x58] sm:$0xf]
      %v171 = vld [vmem:[%s139 + $0x5c] sm:$0xf]
      %v172 = vld [vmem:[%s139 + $0x60] sm:$0xf]
      %v173 = vld [vmem:[%s139 + $0x64] sm:$0xf]
      %v174 = vld [vmem:[%s139 + $0x68] sm:$0xf]
      %v175 = vld [vmem:[%s139 + $0x6c] sm:$0xf]
      %v176 = vld [vmem:[%s139 + $0x70] sm:$0xf]
      %v177 = vld [vmem:[%s139 + $0x74] sm:$0xf]
      %v178 = vld [vmem:[%s139 + $0x78] sm:$0xf]
      %v179 = vld [vmem:[%s139 + $0x7c] sm:$0xf]
      %v180 = vld [vmem:[%s1] sm:$0xf]
      %v181 = vld [vmem:[%s1 + $0x4] sm:$0xf]
      %v182 = vld [vmem:[%s1 + $0x8] sm:$0xf]
      %v183 = vld [vmem:[%s1 + $0xc] sm:$0xf]
      %v184 = vld [vmem:[%s1 + $0x10] sm:$0x3]
      %v217 = vunpack.c.l.b16 %v148
      %v218 = vunpack.c.l.b16 %v149
      %v219 = vunpack.c.l.b16 %v150
      %v220 = vunpack.c.l.b16 %v151
      %v221 = vunpack.c.l.b16 %v152
      %v222 = vunpack.c.l.b16 %v153
      %v223 = vunpack.c.l.b16 %v154
      %v224 = vunpack.c.l.b16 %v155
      %v225 = vunpack.c.l.b16 %v156
      %v226 = vunpack.c.l.b16 %v157
      %v227 = vunpack.c.l.b16 %v158
      %v228 = vunpack.c.l.b16 %v159
      %v229 = vunpack.c.l.b16 %v160
      %v230 = vunpack.c.l.b16 %v161
      %v231 = vunpack.c.l.b16 %v162
      %v232 = vunpack.c.l.b16 %v163
      %v233 = vunpack.c.l.b16 %v164
      %v234 = vunpack.c.l.b16 %v165
      %v235 = vunpack.c.l.b16 %v166
      %v236 = vunpack.c.l.b16 %v167
      %v237 = vunpack.c.l.b16 %v168
      %v238 = vunpack.c.l.b16 %v169
      %v239 = vunpack.c.l.b16 %v170
      %v240 = vunpack.c.l.b16 %v171
      %v241 = vunpack.c.l.b16 %v172
      %v242 = vunpack.c.l.b16 %v173
      %v243 = vunpack.c.l.b16 %v174
      %v244 = vunpack.c.l.b16 %v175
      %v245 = vunpack.c.l.b16 %v176
      %v246 = vunpack.c.l.b16 %v177
      %v247 = vunpack.c.l.b16 %v178
      %v248 = vunpack.c.l.b16 %v179
      %v249 = vpack.c.b16 %v218, %v217
      %v250 = vpack.c.b16 %v220, %v219
      %v251 = vpack.c.b16 %v222, %v221
      %v252 = vpack.c.b16 %v224, %v223
      %v253 = vpack.c.b16 %v226, %v225
      %v254 = vpack.c.b16 %v228, %v227
      %v255 = vpack.c.b16 %v230, %v229
      %v256 = vpack.c.b16 %v232, %v231
      %v257 = vpack.c.b16 %v234, %v233
      %v258 = vpack.c.b16 %v236, %v235
      %v259 = vpack.c.b16 %v238, %v237
      %v260 = vpack.c.b16 %v240, %v239
      %v261 = vpack.c.b16 %v242, %v241
      %v262 = vpack.c.b16 %v244, %v243
      %v263 = vpack.c.b16 %v246, %v245
      %v264 = vpack.c.b16 %v248, %v247
      %v270 = vunpack.c.l.b16 %v180
      %v271 = vunpack.c.l.b16 %v181
      %v272 = vunpack.c.l.b16 %v182
      %v273 = vunpack.c.l.b16 %v183
      %v274 = vunpack.c.l.b16 %v184
      %v275 = vpack.c.b16 %v271, %v270
      %v276 = vpack.c.b16 %v273, %v272
      %v277 = vpack.c.b16 %v274, %v274
      %vm280 = vcmask 293888
      %v282 = vsel %vm280, %v249, 0
      %v285 = vsel %vm280, %v250, 0
      %v288 = vsel %vm280, %v251, 0
      %v291 = vsel %vm280, %v252, 0
      %v294 = vsel %vm280, %v253, 0
      %v297 = vsel %vm280, %v254, 0
      %v300 = vsel %vm280, %v255, 0
      %v303 = vsel %vm280, %v256, 0
      %v306 = vsel %vm280, %v257, 0
      %v309 = vsel %vm280, %v258, 0
      %v312 = vsel %vm280, %v259, 0
      %v315 = vsel %vm280, %v260, 0
      %v318 = vsel %vm280, %v261, 0
      %v321 = vsel %vm280, %v262, 0
      %v324 = vsel %vm280, %v263, 0
      %v327 = vsel %vm280, %v264, 0
      %vm329 = vcmask 1041408
      %v331 = vsel %vm329, %v277, 0
      %333 = vmatprep.subr.bf16.mxu0 0
      %334 = vmatpush1.bf16.msra.mxu0 %v275
      %335 = vmatprep.subr.bf16.mxu0 0
      %336 = vmatpush1.bf16.msra.mxu0 %v276
      %337 = vmatprep.subr.bf16.mxu0 0
      %338 = vmatpush1.bf16.msra.mxu0 %v331
      %339 = vmatprep.subr.bf16.mxu0 0
      %340 = vmatpush1.bf16.msra.mxu0 0
      %341 = vmatprep.subr.bf16.mxu0 0
      %342 = vmatpush1.bf16.msra.mxu0 0
      %343 = vmatprep.subr.bf16.mxu0 0
      %344 = vmatpush1.bf16.msra.mxu0 0
      %345 = vmatprep.subr.bf16.mxu0 0
      %346 = vmatpush1.bf16.msra.mxu0 0
      %347 = vmatprep.subr.bf16.mxu0 0
      %348 = vmatpush1.bf16.msra.mxu0 0
      %349 = vmatprep.subr.bf16.mxu0 0
      %350 = vmatpush1.bf16.msra.mxu0 0
      %351 = vmatprep.subr.bf16.mxu0 0
      %352 = vmatpush1.bf16.msra.mxu0 0
      %353 = vmatprep.subr.bf16.mxu0 0
      %354 = vmatpush1.bf16.msra.mxu0 0
      %355 = vmatprep.subr.bf16.mxu0 0
      %356 = vmatpush1.bf16.msra.mxu0 0
      %357 = vmatprep.subr.bf16.mxu0 0
      %358 = vmatpush1.bf16.msra.mxu0 0
      %359 = vmatprep.subr.bf16.mxu0 0
      %360 = vmatpush1.bf16.msra.mxu0 0
      %361 = vmatprep.subr.bf16.mxu0 0
      %362 = vmatpush1.bf16.msra.mxu0 0
      %363 = vmatprep.subr.bf16.mxu0 0
      %364 = vmatpush1.bf16.msra.mxu0 0
      %365 = vmatprep.mubr.bf16.mxu0 0
      %366 = vmatmul.mubr.bf16.gmra.mrb[0].mxu0 %v282
      %v367 = vpop.f32.mrb[0].mxu0
      %v368 = vadd.f32 0.0, %v367
      %v369 = vpop.f32.mrb[0].mxu0
      %v370 = vpop.f32.mrb[0].mxu0
      %v371 = vadd.f32 0.0, %v370
      %v372 = vpop.f32.mrb[0].mxu0
      %373 = vmatprep.mubr.bf16.mxu0 0
      %374 = vmatmul.mubr.bf16.gmra.mrb[0].mxu0 %v285
      %v375 = vpop.f32.mrb[0].mxu0
      %v376 = vadd.f32 0.0, %v375
      %v377 = vpop.f32.mrb[0].mxu0
      %v378 = vpop.f32.mrb[0].mxu0
      %v379 = vadd.f32 0.0, %v378
      %v380 = vpop.f32.mrb[0].mxu0
      %381 = vmatprep.mubr.bf16.mxu0 0
      %382 = vmatmul.mubr.bf16.gmra.mrb[0].mxu0 %v288
      %v383 = vpop.f32.mrb[0].mxu0
      %v384 = vadd.f32 0.0, %v383
      %v385 = vpop.f32.mrb[0].mxu0
      %v386 = vpop.f32.mrb[0].mxu0
      %v387 = vadd.f32 0.0, %v386
      %v388 = vpop.f32.mrb[0].mxu0
      %389 = vmatprep.mubr.bf16.mxu0 0
      %390 = vmatmul.mubr.bf16.gmra.mrb[0].mxu0 %v291
      %v391 = vpop.f32.mrb[0].mxu0
      %v392 = vadd.f32 0.0, %v391
      %v393 = vpop.f32.mrb[0].mxu0
      %v394 = vpop.f32.mrb[0].mxu0
      %v395 = vadd.f32 0.0, %v394
      %v396 = vpop.f32.mrb[0].mxu0
      %397 = vmatprep.mubr.bf16.mxu0 0
      %398 = vmatmul.mubr.bf16.gmra.mrb[0].mxu0 %v294
      %v399 = vpop.f32.mrb[0].mxu0
      %v400 = vadd.f32 0.0, %v399
      %v401 = vpop.f32.mrb[0].mxu0
      %v402 = vpop.f32.mrb[0].mxu0
      %v403 = vadd.f32 0.0, %v402
      %v404 = vpop.f32.mrb[0].mxu0
      %405 = vmatprep.mubr.bf16.mxu0 0
      %406 = vmatmul.mubr.bf16.gmra.mrb[0].mxu0 %v297
      %v407 = vpop.f32.mrb[0].mxu0
      %v408 = vadd.f32 0.0, %v407
      %v409 = vpop.f32.mrb[0].mxu0
      %v410 = vpop.f32.mrb[0].mxu0
      %v411 = vadd.f32 0.0, %v410
      %v412 = vpop.f32.mrb[0].mxu0
      %413 = vmatprep.mubr.bf16.mxu0 0
      %414 = vmatmul.mubr.bf16.gmra.mrb[0].mxu0 %v300
      %v415 = vpop.f32.mrb[0].mxu0
      %v416 = vadd.f32 0.0, %v415
      %v417 = vpop.f32.mrb[0].mxu0
      %v418 = vpop.f32.mrb[0].mxu0
      %v419 = vadd.f32 0.0, %v418
      %v420 = vpop.f32.mrb[0].mxu0
      %421 = vmatprep.mubr.bf16.mxu0 0
      %422 = vmatmul.mubr.bf16.gmra.mrb[0].mxu0 %v303
      %v423 = vpop.f32.mrb[0].mxu0
      %v424 = vadd.f32 0.0, %v423
      %v425 = vpop.f32.mrb[0].mxu0
      %v426 = vpop.f32.mrb[0].mxu0
      %v427 = vadd.f32 0.0, %v426
      %v428 = vpop.f32.mrb[0].mxu0
      %429 = vmatprep.mubr.bf16.mxu0 0
      %430 = vmatmul.mubr.bf16.gmra.mrb[0].mxu0 %v306
      %v431 = vpop.f32.mrb[0].mxu0
      %v432 = vadd.f32 0.0, %v431
      %v433 = vpop.f32.mrb[0].mxu0
      %v434 = vpop.f32.mrb[0].mxu0
      %v435 = vadd.f32 0.0, %v434
      %v436 = vpop.f32.mrb[0].mxu0
      %437 = vmatprep.mubr.bf16.mxu0 0
      %438 = vmatmul.mubr.bf16.gmra.mrb[0].mxu0 %v309
      %v439 = vpop.f32.mrb[0].mxu0
      %v440 = vadd.f32 0.0, %v439
      %v441 = vpop.f32.mrb[0].mxu0
      %v442 = vpop.f32.mrb[0].mxu0
      %v443 = vadd.f32 0.0, %v442
      %v444 = vpop.f32.mrb[0].mxu0
      %445 = vmatprep.mubr.bf16.mxu0 0
      %446 = vmatmul.mubr.bf16.gmra.mrb[0].mxu0 %v312
      %v447 = vpop.f32.mrb[0].mxu0
      %v448 = vadd.f32 0.0, %v447
      %v449 = vpop.f32.mrb[0].mxu0
      %v450 = vpop.f32.mrb[0].mxu0
      %v451 = vadd.f32 0.0, %v450
      %v452 = vpop.f32.mrb[0].mxu0
      %453 = vmatprep.mubr.bf16.mxu0 0
      %454 = vmatmul.mubr.bf16.gmra.mrb[0].mxu0 %v315
      %v455 = vpop.f32.mrb[0].mxu0
      %v456 = vadd.f32 0.0, %v455
      %v457 = vpop.f32.mrb[0].mxu0
      %v458 = vpop.f32.mrb[0].mxu0
      %v459 = vadd.f32 0.0, %v458
      %v460 = vpop.f32.mrb[0].mxu0
      %461 = vmatprep.mubr.bf16.mxu0 0
      %462 = vmatmul.mubr.bf16.gmra.mrb[0].mxu0 %v318
      %v463 = vpop.f32.mrb[0].mxu0
      %v464 = vadd.f32 0.0, %v463
      %v465 = vpop.f32.mrb[0].mxu0
      %v466 = vpop.f32.mrb[0].mxu0
      %v467 = vadd.f32 0.0, %v466
      %v468 = vpop.f32.mrb[0].mxu0
      %469 = vmatprep.mubr.bf16.mxu0 0
      %470 = vmatmul.mubr.bf16.gmra.mrb[0].mxu0 %v321
      %v471 = vpop.f32.mrb[0].mxu0
      %v472 = vadd.f32 0.0, %v471
      %v473 = vpop.f32.mrb[0].mxu0
      %v474 = vpop.f32.mrb[0].mxu0
      %v475 = vadd.f32 0.0, %v474
      %v476 = vpop.f32.mrb[0].mxu0
      %477 = vmatprep.mubr.bf16.mxu0 0
      %478 = vmatmul.mubr.bf16.gmra.mrb[0].mxu0 %v324
      %v479 = vpop.f32.mrb[0].mxu0
      %v480 = vadd.f32 0.0, %v479
      %v481 = vpop.f32.mrb[0].mxu0
      %v482 = vpop.f32.mrb[0].mxu0
      %v483 = vadd.f32 0.0, %v482
      %v484 = vpop.f32.mrb[0].mxu0
      %485 = vmatprep.mubr.bf16.mxu0 0
      %486 = vmatmul.mubr.bf16.gmra.mrb[0].mxu0 %v327
      %v487 = vpop.f32.mrb[0].mxu0
      %v488 = vadd.f32 0.0, %v487
      %v489 = vpop.f32.mrb[0].mxu0
      %v490 = vpop.f32.mrb[0].mxu0
      %v491 = vadd.f32 0.0, %v490
      %v492 = vpop.f32.mrb[0].mxu0
      %493 = vdwg.mxu0
      %v494 = vpack.c.bf16 %v371, %v368
      %v495 = vpack.c.bf16 %v379, %v376
      %v496 = vpack.c.bf16 %v387, %v384
      %v497 = vpack.c.bf16 %v395, %v392
      %v498 = vpack.c.bf16 %v403, %v400
      %v499 = vpack.c.bf16 %v411, %v408
      %v500 = vpack.c.bf16 %v419, %v416
      %v501 = vpack.c.bf16 %v427, %v424
      %v502 = vpack.c.bf16 %v435, %v432
      %v503 = vpack.c.bf16 %v443, %v440
      %v504 = vpack.c.bf16 %v451, %v448
      %v505 = vpack.c.bf16 %v459, %v456
      %v506 = vpack.c.bf16 %v467, %v464
      %v507 = vpack.c.bf16 %v475, %v472
      %v508 = vpack.c.bf16 %v483, %v480
      %v509 = vpack.c.bf16 %v491, %v488
      %v526 = vunpack.c.l.b16 %v494
      %v527 = vunpack.c.h.b16 %v494
      %v528 = vunpack.c.l.b16 %v495
      %v529 = vunpack.c.h.b16 %v495
      %v530 = vunpack.c.l.b16 %v496
      %v531 = vunpack.c.h.b16 %v496
      %v532 = vunpack.c.l.b16 %v497
      %v533 = vunpack.c.h.b16 %v497
      %v534 = vunpack.c.l.b16 %v498
      %v535 = vunpack.c.h.b16 %v498
      %v536 = vunpack.c.l.b16 %v499
      %v537 = vunpack.c.h.b16 %v499
      %v538 = vunpack.c.l.b16 %v500
      %v539 = vunpack.c.h.b16 %v500
      %v540 = vunpack.c.l.b16 %v501
      %v541 = vunpack.c.h.b16 %v501
      %v542 = vunpack.c.l.b16 %v502
      %v543 = vunpack.c.h.b16 %v502
      %v544 = vunpack.c.l.b16 %v503
      %v545 = vunpack.c.h.b16 %v503
      %v546 = vunpack.c.l.b16 %v504
      %v547 = vunpack.c.h.b16 %v504
      %v548 = vunpack.c.l.b16 %v505
      %v549 = vunpack.c.h.b16 %v505
      %v550 = vunpack.c.l.b16 %v506
      %v551 = vunpack.c.h.b16 %v506
      %v552 = vunpack.c.l.b16 %v507
      %v553 = vunpack.c.h.b16 %v507
      %v554 = vunpack.c.l.b16 %v508
      %v555 = vunpack.c.h.b16 %v508
      %v556 = vunpack.c.l.b16 %v509
      %v557 = vunpack.c.h.b16 %v509
      %v558 = vpack.c.b16 %v526, %v526
      %v559 = vpack.c.b16 %v527, %v527
      %v560 = vpack.c.b16 %v528, %v528
      %v561 = vpack.c.b16 %v529, %v529
      %v562 = vpack.c.b16 %v530, %v530
      %v563 = vpack.c.b16 %v531, %v531
      %v564 = vpack.c.b16 %v532, %v532
      %v565 = vpack.c.b16 %v533, %v533
      %v566 = vpack.c.b16 %v534, %v534
      %v567 = vpack.c.b16 %v535, %v535
      %v568 = vpack.c.b16 %v536, %v536
      %v569 = vpack.c.b16 %v537, %v537
      %v570 = vpack.c.b16 %v538, %v538
      %v571 = vpack.c.b16 %v539, %v539
      %v572 = vpack.c.b16 %v540, %v540
      %v573 = vpack.c.b16 %v541, %v541
      %v574 = vpack.c.b16 %v542, %v542
      %v575 = vpack.c.b16 %v543, %v543
      %v576 = vpack.c.b16 %v544, %v544
      %v577 = vpack.c.b16 %v545, %v545
      %v578 = vpack.c.b16 %v546, %v546
      %v579 = vpack.c.b16 %v547, %v547
      %v580 = vpack.c.b16 %v548, %v548
      %v581 = vpack.c.b16 %v549, %v549
      %v582 = vpack.c.b16 %v550, %v550
      %v583 = vpack.c.b16 %v551, %v551
      %v584 = vpack.c.b16 %v552, %v552
      %v585 = vpack.c.b16 %v553, %v553
      %v586 = vpack.c.b16 %v554, %v554
      %v587 = vpack.c.b16 %v555, %v555
      %v588 = vpack.c.b16 %v556, %v556
      %v589 = vpack.c.b16 %v557, %v557
      %vm622 = vcmask 191488
      %623 = vst.msk [vmem:[%s145] sm:$0xf] %vm622, %v558
      %624 = vst.msk [vmem:[%s145 + $0x4] sm:$0xf] %vm622, %v559
      %625 = vst.msk [vmem:[%s145 + $0x8] sm:$0xf] %vm622, %v560
      %626 = vst.msk [vmem:[%s145 + $0xc] sm:$0xf] %vm622, %v561
      %627 = vst.msk [vmem:[%s145 + $0x10] sm:$0xf] %vm622, %v562
      %628 = vst.msk [vmem:[%s145 + $0x14] sm:$0xf] %vm622, %v563
      %629 = vst.msk [vmem:[%s145 + $0x18] sm:$0xf] %vm622, %v564
      %630 = vst.msk [vmem:[%s145 + $0x1c] sm:$0xf] %vm622, %v565
      %631 = vst.msk [vmem:[%s145 + $0x20] sm:$0xf] %vm622, %v566
      %632 = vst.msk [vmem:[%s145 + $0x24] sm:$0xf] %vm622, %v567
      %633 = vst.msk [vmem:[%s145 + $0x28] sm:$0xf] %vm622, %v568
      %634 = vst.msk [vmem:[%s145 + $0x2c] sm:$0xf] %vm622, %v569
      %635 = vst.msk [vmem:[%s145 + $0x30] sm:$0xf] %vm622, %v570
      %636 = vst.msk [vmem:[%s145 + $0x34] sm:$0xf] %vm622, %v571
      %637 = vst.msk [vmem:[%s145 + $0x38] sm:$0xf] %vm622, %v572
      %638 = vst.msk [vmem:[%s145 + $0x3c] sm:$0xf] %vm622, %v573
      %639 = vst.msk [vmem:[%s145 + $0x40] sm:$0xf] %vm622, %v574
      %640 = vst.msk [vmem:[%s145 + $0x44] sm:$0xf] %vm622, %v575
      %641 = vst.msk [vmem:[%s145 + $0x48] sm:$0xf] %vm622, %v576
      %642 = vst.msk [vmem:[%s145 + $0x4c] sm:$0xf] %vm622, %v577
      %643 = vst.msk [vmem:[%s145 + $0x50] sm:$0xf] %vm622, %v578
      %644 = vst.msk [vmem:[%s145 + $0x54] sm:$0xf] %vm622, %v579
      %645 = vst.msk [vmem:[%s145 + $0x58] sm:$0xf] %vm622, %v580
      %646 = vst.msk [vmem:[%s145 + $0x5c] sm:$0xf] %vm622, %v581
      %647 = vst.msk [vmem:[%s145 + $0x60] sm:$0xf] %vm622, %v582
      %648 = vst.msk [vmem:[%s145 + $0x64] sm:$0xf] %vm622, %v583
      %649 = vst.msk [vmem:[%s145 + $0x68] sm:$0xf] %vm622, %v584
      %650 = vst.msk [vmem:[%s145 + $0x6c] sm:$0xf] %vm622, %v585
      %651 = vst.msk [vmem:[%s145 + $0x70] sm:$0xf] %vm622, %v586
      %652 = vst.msk [vmem:[%s145 + $0x74] sm:$0xf] %vm622, %v587
      %653 = vst.msk [vmem:[%s145 + $0x78] sm:$0xf] %vm622, %v588
      %654 = vst.msk [vmem:[%s145 + $0x7c] sm:$0xf] %vm622, %v589
      %s655 = smul.u32 32, %s13
      %p656 = scmp.lt.s32.totalorder %s655, 63
      %s657 = scalar_select %p656, %s655, 63
      %s658 = smul.addr %s657, 4
      %s659 = scalar_lea.vmem %s2, %s658
      // Predicated region
      $region29: #{tpu_custom_call.1} parent=27 // pred_check
        %p660 = pneg %p78
      $region30: #{tpu_custom_call.1} parent=27 // pred_check_branch
        %662 = sbr.rel (%p660) target = $region32
      $region31: #{tpu_custom_call.1} parent=27 // pred_region
        %s663 = smul.u32 32, %s13
      $region32: #{tpu_custom_call.1} parent=27 // pred_fallthru
        _
    $region28: #{tpu_custom_call.1} parent=5 // pred_fallthru
      _
    %p664 = scmp.le.s32.totalorder 2, %s8
    // Predicated region
    $region33: #{tpu_custom_call.1} parent=5 // pred_check
      %p665 = pneg %p664
    $region34: #{tpu_custom_call.1} parent=5 // pred_check_branch
      %667 = sbr.rel (%p665) target = $region36
    $region35: #{tpu_custom_call.1} parent=5 // pred_region
      %s668 = ssub.s32 %s8, 2
      // Predicated region
      $region37: #{tpu_custom_call.1} parent=35 // pred_check
        %p669 = pneg %p84
      $region38: #{tpu_custom_call.1} parent=35 // pred_check_branch
        %671 = sbr.rel (%p669) target = $region40
      $region39: #{tpu_custom_call.1} parent=35 // pred_region
        %s672 = smul.u32 32, %s14
        %p673 = scmp.lt.s32.totalorder %s672, 63
        %s674 = scalar_select %p673, %s672, 63
        %s675 = smul.addr %s674, 4
        %s676 = scalar_lea.vmem %s2, %s675
      $region40: #{tpu_custom_call.1} parent=35 // pred_fallthru
        _
    $region36: #{tpu_custom_call.1} parent=5 // pred_fallthru
      _
  $region6: #{tpu_custom_call.1} parent=0 // loop_footer
    %s12 = sadd.s32 1, %s8
  $region7: #{tpu_custom_call.1} parent=0 // loop_footer_branch
    %7 = sbr.rel target = $region3
  $region8: #{tpu_custom_call.1} parent=0 // loop_exit
    _

</llo_original>
